<compile_context>
chip_gen: v7x
topology: tpu7x:2x2x1
jax: 0.10.0
libtpu: 0.0.40
codegen_flags: <defaults>
</compile_context>

<pallas_src>
import functools
import math

import jax
import jax.numpy as jnp
from jax.experimental import pallas as pl
from jax.experimental.pallas import tpu as pltpu


_BLOCK_BYTES = 8 * 1024 * 1024      # target bytes per input block (per buffer)


def _round_up(x, m):
    return (x + m - 1) // m * m


def _largest_aligned_divisor(d, cap):
    """Largest divisor of d that is a multiple of 128 and <= cap (d % 128 == 0)."""
    m = d // 128
    cap_m = max(1, cap // 128)
    best = 1
    k = 1
    while k * k <= m:
        if m % k == 0:
            for c in (k, m // k):
                if c <= cap_m and c > best:
                    best = c
        k += 1
    return best * 128


def _sumsq_kernel(z_ref, out_ref, *, loc, n_rows, mask_rows):
    """Accumulate per-sample, 128-lane partial sums of (z - loc)^2.

    z_ref   : VMEM (TM, TD) tile of z (any float dtype; upcast to f32)
    out_ref : VMEM (TM, 128) f32 accumulator, resident across the D grid axis
    """
    k = pl.program_id(1)

    @pl.when(k == 0)
    def _init():
        out_ref[...] = jnp.zeros_like(out_ref)

    tm, td = z_ref.shape
    n_groups = td // 128

    # Per 128-lane group: static ref view -> cast -> (subtract loc) -> square.
    # Avoids materializing a full (TM, TD) f32 intermediate.
    partials = []
    for g in range(n_groups):
        zg = z_ref[:, g * 128:(g + 1) * 128].astype(jnp.float32)
        if loc != 0.0:                                   # trace-time constant
            zg = zg - jnp.float32(loc)
        partials.append(zg * zg)

    # Tree-combine the group partials (log-depth dependent add chain).
    while len(partials) > 1:
        nxt = [a + b for a, b in zip(partials[0::2], partials[1::2])]
        if len(partials) % 2:
            nxt.append(partials[-1])
        partials = nxt
    acc = partials[0]                                    # (TM, 128) f32

    if mask_rows:
        # Partial tail block along N: zero out rows beyond n_rows so garbage
        # from the out-of-bounds portion of the edge block never enters sumsq.
        i = pl.program_id(0)
        row = jax.lax.broadcasted_iota(jnp.int32, (tm, 128), 0) + i * tm
        acc = jnp.where(row < n_rows, acc, 0.0)

    out_ref[...] += acc


def realnvp_loss(z_nchw, log_det_J, *, loc=0.0, scale=1.0):
    """JAX wrapper. z_nchw: (N, C, H, W); log_det_J: (N,). Returns dict of scalars."""
    N = z_nchw.shape[0]
    D = int(math.prod(z_nchw.shape[1:]))

    # Stream z in its native dtype (bf16 input halves HBM bytes); f32 accumulate.
    z2 = z_nchw.reshape(N, D)
    itemsize = jnp.dtype(z2.dtype).itemsize
    sub = 16 if itemsize == 2 else 8

    # --- D tiling: pick TD as an exact multiple-of-128 divisor of D ----------
    D_eff = D
    if D % 128 != 0:
        # Rare fallback (feature count not lane-aligned): minimally pad the
        # feature axis only.  Padded entries equal `loc`, contributing ~0 to
        # sum((z-loc)^2).  The batch axis is never padded.
        D_eff = _round_up(D, 128)
        z2 = jnp.pad(z2, ((0, 0), (0, D_eff - D)), constant_values=loc)

    lane_cap = max(128, 16384 // itemsize)           # <= 16 KiB per row per block
    TD = _largest_aligned_divisor(D_eff, min(lane_cap, D_eff))

    # --- N tiling: ~8 MiB input blocks, no padding, in-kernel tail mask ------
    TM = (_BLOCK_BYTES // (TD * itemsize)) // sub * sub
    TM = max(sub, min(1024, TM))
    if TM >= N:
        if N >= 2 * sub:
            # Keep >= 2 row tiles so the parallel axis can span both
            # TensorCores on megacore parts (v7x).
            TM = _round_up((N + 1) // 2, sub)
        else:
            TM = N                                    # single full-extent row tile
    mask_rows = (N % TM) != 0

    kernel = functools.partial(
        _sumsq_kernel, loc=float(loc), n_rows=N, mask_rows=mask_rows)

    partial_sums = pl.pallas_call(
        kernel,
        out_shape=jax.ShapeDtypeStruct((N, 128), jnp.float32),
        grid_spec=pltpu.PrefetchScalarGridSpec(
            num_scalar_prefetch=0,
            grid=(pl.cdiv(N, TM), D_eff // TD),       # reduction axis (D) last
            in_specs=[pl.BlockSpec((TM, TD), lambda i, k: (i, k))],
            out_specs=pl.BlockSpec((TM, 128), lambda i, k: (i, 0)),
        ),
        compiler_params=pltpu.CompilerParams(
            # NOTE: the D axis must stay "arbitrary" (resident accumulator);
            # only the N axis may be parallel / core-parallel.
            dimension_semantics=("parallel", "arbitrary"),
            vmem_limit_bytes=32 * 1024 * 1024,
        ),
    )(z2)

    # Cheap O(N) epilogue in plain JAX: fold Normal-logpdf constants, log_det,
    # nll, bits-per-dim and the four means.
    sumsq = jnp.sum(partial_sums, axis=1)                    # (N,)
    scale_f = jnp.float32(scale)
    log_norm = jnp.float32(D) * (0.5 * jnp.log(2.0 * jnp.pi).astype(jnp.float32)
                                 + jnp.log(scale_f))
    log_p_z = -0.5 * sumsq / (scale_f * scale_f) - log_norm  # (N,)
    log_det = log_det_J.reshape(N).astype(jnp.float32)
    log_p_x = log_p_z + log_det
    nll = -log_p_x
    bpd = nll / (jnp.log(jnp.float32(2.0)) * jnp.float32(D))

    return {
        "nll": jnp.mean(nll),
        "log_likelihood": jnp.mean(log_p_x),
        "log_det": jnp.mean(log_det),
        "loss": jnp.mean(bpd),
    }


def _reference(z_nchw, log_det_J, loc=0.0, scale=1.0):
    """Pure-JAX reference mirroring the PyTorch forward."""
    N = z_nchw.shape[0]
    D = int(math.prod(z_nchw.shape[1:]))
    z = z_nchw.astype(jnp.float32)
    logp = jax.scipy.stats.norm.logpdf(z, loc=loc, scale=scale)
    log_p_z = jnp.sum(logp.reshape(N, -1), axis=1)
    log_p_x = log_p_z + log_det_J.astype(jnp.float32)
    nll = -log_p_x
    bpd = nll * (1.0 / jnp.log(2.0)) / D
    return {
        "nll": jnp.mean(nll),
        "log_likelihood": jnp.mean(log_p_x),
        "log_det": jnp.mean(log_det_J.astype(jnp.float32)),
        "loss": jnp.mean(bpd),
    }


def _check(z, log_det_J, tag):
    out = realnvp_loss(z, log_det_J)
    out = jax.tree_util.tree_map(jax.block_until_ready, out)
    ref = _reference(z, log_det_J)
    for k in ("nll", "log_likelihood", "log_det", "loss"):
        assert jnp.allclose(out[k], ref[k], rtol=1e-5, atol=1e-4), (
            tag, k, out[k], ref[k])


if __name__ == "__main__":
    key = jax.random.PRNGKey(0)
    k1, k2, k3, k4 = jax.random.split(key, 4)

    # Main case: small RealNVP-like latent, lane-aligned D (D = 4*16*16 = 1024).
    N, C, H, W = 2, 4, 16, 16
    z = jax.random.normal(k1, (N, C, H, W), dtype=jnp.float32)
    log_det_J = jax.random.normal(k2, (N,), dtype=jnp.float32) * 10.0
    _check(z, log_det_J, "aligned")

    # Secondary case: exercises the in-kernel N-tail row mask (N=20, TM=16)
    # and the rare non-lane-aligned-D fallback (D = 3*8*8 = 192).
    N2 = 20
    z2 = jax.random.normal(k3, (N2, 3, 8, 8), dtype=jnp.float32)
    log_det_J2 = jax.random.normal(k4, (N2,), dtype=jnp.float32) * 5.0
    _check(z2, log_det_J2, "tail")

    print("KERNEL_OK")
</pallas_src>

<mosaic_0001>
module attributes {stable_mosaic.version = 11 : i64} {
  func.func @_sumsq_kernel(%arg0: i32, %arg1: i32, %arg2: memref<2x1024xf32, #tpu.memory_space<vmem>>, %arg3: memref<2x128xf32, #tpu.memory_space<vmem>>) attributes {dimension_semantics = [#tpu.dimension_semantics<parallel>, #tpu.dimension_semantics<arbitrary>], iteration_bounds = array<i64: 1, 1>, scalar_prefetch = 0 : i64, scratch_operands = 0 : i64, tpu.core_type = #tpu.core_type<tc>, window_params = [{transform_indices = @transform_0, window_bounds = array<i64: 2, 1024>}, {transform_indices = @transform_1, window_bounds = array<i64: 2, 128>}]} {
    %c0_i32 = arith.constant 0 : i32
    %0 = arith.cmpi eq, %arg1, %c0_i32 : i32
    %1 = arith.extui %0 : i1 to i32
    %c0_i32_0 = arith.constant 0 : i32
    %2 = arith.cmpi ne, %1, %c0_i32_0 : i32
    scf.if %2 {
      %cst = arith.constant 0.000000e+00 : f32
      %29 = vector.broadcast %cst : f32 to vector<2x128xf32>
      %c0_13 = arith.constant 0 : index
      %c0_14 = arith.constant 0 : index
      %30 = vector.load %arg3[%c0_13, %c0_14] : memref<2x128xf32, #tpu.memory_space<vmem>>, vector<2x128xf32>
      tpu.vector_store %arg3[%c0_13, %c0_14], %29 {strides = array<i32>} : memref<2x128xf32, #tpu.memory_space<vmem>>, vector<2x128xf32>,
    } else {
    }
    %c0 = arith.constant 0 : index
    %c0_1 = arith.constant 0 : index
    %3 = vector.load %arg2[%c0, %c0_1] : memref<2x1024xf32, #tpu.memory_space<vmem>>, vector<2x128xf32>
    %4 = arith.mulf %3, %3 : vector<2x128xf32>
    %c0_2 = arith.constant 0 : index
    %c128 = arith.constant 128 : index
    %5 = vector.load %arg2[%c0_2, %c128] : memref<2x1024xf32, #tpu.memory_space<vmem>>, vector<2x128xf32>
    %6 = arith.mulf %5, %5 : vector<2x128xf32>
    %c0_3 = arith.constant 0 : index
    %c256 = arith.constant 256 : index
    %7 = vector.load %arg2[%c0_3, %c256] : memref<2x1024xf32, #tpu.memory_space<vmem>>, vector<2x128xf32>
    %8 = arith.mulf %7, %7 : vector<2x128xf32>
    %c0_4 = arith.constant 0 : index
    %c384 = arith.constant 384 : index
    %9 = vector.load %arg2[%c0_4, %c384] : memref<2x1024xf32, #tpu.memory_space<vmem>>, vector<2x128xf32>
    %10 = arith.mulf %9, %9 : vector<2x128xf32>
    %c0_5 = arith.constant 0 : index
    %c512 = arith.constant 512 : index
    %11 = vector.load %arg2[%c0_5, %c512] : memref<2x1024xf32, #tpu.memory_space<vmem>>, vector<2x128xf32>
    %12 = arith.mulf %11, %11 : vector<2x128xf32>
    %c0_6 = arith.constant 0 : index
    %c640 = arith.constant 640 : index
    %13 = vector.load %arg2[%c0_6, %c640] : memref<2x1024xf32, #tpu.memory_space<vmem>>, vector<2x128xf32>
    %14 = arith.mulf %13, %13 : vector<2x128xf32>
    %c0_7 = arith.constant 0 : index
    %c768 = arith.constant 768 : index
    %15 = vector.load %arg2[%c0_7, %c768] : memref<2x1024xf32, #tpu.memory_space<vmem>>, vector<2x128xf32>
    %16 = arith.mulf %15, %15 : vector<2x128xf32>
    %c0_8 = arith.constant 0 : index
    %c896 = arith.constant 896 : index
    %17 = vector.load %arg2[%c0_8, %c896] : memref<2x1024xf32, #tpu.memory_space<vmem>>, vector<2x128xf32>
    %18 = arith.mulf %17, %17 : vector<2x128xf32>
    %19 = arith.addf %4, %6 : vector<2x128xf32>
    %20 = arith.addf %8, %10 : vector<2x128xf32>
    %21 = arith.addf %12, %14 : vector<2x128xf32>
    %22 = arith.addf %16, %18 : vector<2x128xf32>
    %23 = arith.addf %19, %20 : vector<2x128xf32>
    %24 = arith.addf %21, %22 : vector<2x128xf32>
    %25 = arith.addf %23, %24 : vector<2x128xf32>
    %c0_9 = arith.constant 0 : index
    %c0_10 = arith.constant 0 : index
    %26 = vector.load %arg3[%c0_9, %c0_10] : memref<2x128xf32, #tpu.memory_space<vmem>>, vector<2x128xf32>
    %27 = arith.addf %26, %25 : vector<2x128xf32>
    %c0_11 = arith.constant 0 : index
    %c0_12 = arith.constant 0 : index
    %28 = vector.load %arg3[%c0_11, %c0_12] : memref<2x128xf32, #tpu.memory_space<vmem>>, vector<2x128xf32>
    tpu.vector_store %arg3[%c0_11, %c0_12], %27 {strides = array<i32>} : memref<2x128xf32, #tpu.memory_space<vmem>>, vector<2x128xf32>,
    return
  }
  func.func @transform_0(%arg0: i32, %arg1: i32) -> (i32, i32) {
    %c0_i32 = arith.constant 0 : i32
    return %arg0, %arg1 : i32, i32
  }
  func.func @transform_1(%arg0: i32, %arg1: i32) -> (i32, i32) {
    %c0_i32 = arith.constant 0 : i32
    %c0_i32_0 = arith.constant 0 : i32
    return %arg0, %c0_i32 : i32, i32
  }
}

</mosaic_0001>

<llo_original>
// kernel: tpu_custom_call.1
$region0: #{tpu_custom_call.1}
  #allocation0 [shape = 'u32[]', space=smem, size = 0x4, offset = 0x4, fixed_abs, tag = 'smem constant byte address 0x4 - core index']
  #allocation1 [shape = 'u32[144,128]{1,0:T(1,128)}', space=vmem, size = 0x12000, scoped, tag = 'internal scratch']
  %s0 = inlined_call_operand.hbm [shape: f32[2,1024], index: 0, kind: input, shape index: {}]
  %s1 = inlined_call_operand.hbm [shape: f32[2,128], index: 1, kind: output, shape index: {}]
  %s2 = sld [smem:[#allocation0]]
  $region22: #{tpu_custom_call.1} parent=0
    _
  %s4 = ssub.s32 1, %s2
  %s5 = scalar_select 0, %s4, %s2
  $region1: #{tpu_custom_call.1} parent=0
    #allocation2 [shape = 'u8[8192]{0}', space=vmem, size = 0x2000, scoped, tag = 'input window, operand 0, single buffered']
    #allocation3 [shape = 's32[1]{0}', space=sflag, size = 0x4, scoped, tag = 'scoped memory for tpu_custom_call.1']
    #allocation4 [shape = 's32[1]{0}', space=sflag, size = 0x4, scoped, tag = 'scoped memory for tpu_custom_call.1']
    #allocation5 [shape = 'u8[1024]{0}', space=vmem, size = 0x400, scoped, tag = 'output window, operand 0, single buffered']
    %6 = vsyncpa [#allocation3], 0
    %7 = vsyncpa [#allocation4], 0
    // Predicated region
    $region2: #{tpu_custom_call.1} parent=1 // pred_check
      _
    $region3: #{tpu_custom_call.1} parent=1 // pred_check_branch
      %9 = sbr.rel (0) target = $region5
    $region4: #{tpu_custom_call.1} parent=1 // pred_region
      %s11 = ssub.s32 256, 256
      %12 = vsyncadd [#allocation3], %s11
      %s14 = sshll.u32 [#allocation2], 4
      %s15 = int_to_ptr.vmem [resolvable:$true] %s14
      %17 = dma.hbm_to_vmem [thread:$0]  %s0, 256, %s15, [#allocation3]
    $region5: #{tpu_custom_call.1} parent=1 // pred_fallthru
      _
    // Predicated region
    $region6: #{tpu_custom_call.1} parent=1 // pred_check
      _
    $region7: #{tpu_custom_call.1} parent=1 // pred_check_branch
      %19 = sbr.rel (0) target = $region9
    $region8: #{tpu_custom_call.1} parent=1 // pred_region
      %20 = dma.done [#allocation3], 256
    $region9: #{tpu_custom_call.1} parent=1 // pred_fallthru
      _
    %p21 = scmp.eq.s32.totalorder 0, 0
    // Predicated region
    $region10: #{tpu_custom_call.1} parent=1 // pred_check
      %p22 = pneg %p21
    $region11: #{tpu_custom_call.1} parent=1 // pred_check_branch
      %24 = sbr.rel (%p22) target = $region13
    $region12: #{tpu_custom_call.1} parent=1 // pred_region
      %25 = vst [vmem:[#allocation5] sm:$0x3] 0.0
    $region13: #{tpu_custom_call.1} parent=1 // pred_fallthru
      _
    %v26 = vld [vmem:[#allocation2] sm:$0x3]
    %v27 = vmul.f32 %v26, %v26
    %v28 = vld [vmem:[#allocation2 + $0x2] sm:$0x3]
    %v29 = vmul.f32 %v28, %v28
    %v30 = vld [vmem:[#allocation2 + $0x4] sm:$0x3]
    %v31 = vmul.f32 %v30, %v30
    %v32 = vld [vmem:[#allocation2 + $0x6] sm:$0x3]
    %v33 = vmul.f32 %v32, %v32
    %v34 = vld [vmem:[#allocation2 + $0x8] sm:$0x3]
    %v35 = vmul.f32 %v34, %v34
    %v36 = vld [vmem:[#allocation2 + $0xa] sm:$0x3]
    %v37 = vmul.f32 %v36, %v36
    %v38 = vld [vmem:[#allocation2 + $0xc] sm:$0x3]
    %v39 = vmul.f32 %v38, %v38
    %v40 = vld [vmem:[#allocation2 + $0xe] sm:$0x3]
    %v41 = vmul.f32 %v40, %v40
    %v42 = vadd.f32 %v27, %v29
    %v43 = vadd.f32 %v31, %v33
    %v44 = vadd.f32 %v35, %v37
    %v45 = vadd.f32 %v39, %v41
    %v46 = vadd.f32 %v42, %v43
    %v47 = vadd.f32 %v44, %v45
    %v48 = vadd.f32 %v46, %v47
    %v49 = vld [vmem:[#allocation5] sm:$0x3]
    %v50 = vadd.f32 %v49, %v48
    %51 = vst [vmem:[#allocation5] sm:$0x3] %v50
    // Predicated region
    $region14: #{tpu_custom_call.1} parent=1 // pred_check
      _
    $region15: #{tpu_custom_call.1} parent=1 // pred_check_branch
      %53 = sbr.rel (0) target = $region17
    $region16: #{tpu_custom_call.1} parent=1 // pred_region
      %s55 = ssub.s32 32, 32
      %56 = vsyncadd [#allocation4], %s55
      %s58 = sshll.u32 [#allocation5], 4
      %s59 = int_to_ptr.vmem [resolvable:$true] %s58
      %61 = dma.vmem_to_hbm [thread:$0]  %s59, 32, %s1, [#allocation4]
    $region17: #{tpu_custom_call.1} parent=1 // pred_fallthru
      _
    // Predicated region
    $region18: #{tpu_custom_call.1} parent=1 // pred_check
      _
    $region19: #{tpu_custom_call.1} parent=1 // pred_check_branch
      %63 = sbr.rel (0) target = $region21
    $region20: #{tpu_custom_call.1} parent=1 // pred_region
      %64 = dma.done [#allocation4], 32
    $region21: #{tpu_custom_call.1} parent=1 // pred_fallthru
      _
    %65 = vsyncpa [#allocation3], 1
    %66 = vsyncpa [#allocation4], 1

</llo_original>
